<compile_context>
chip_gen: v7x
topology: tpu7x:2x2x1
jax: 0.10.0
libtpu: 0.0.40
codegen_flags: <defaults>
</compile_context>

<pallas_src>
import jax
import jax.numpy as jnp
from jax.experimental import pallas as pl
from jax.experimental.pallas import tpu as pltpu

NUM_INPUTS = 3
NUM_HIDDEN = 3
NUM_STEPS = 8
BETA = 0.0          # Net_Chip default: loss=0 -> LeakySurrogate beta=0
LANES = 128         # lane-pad everything so loads/stores are unmasked
PACK_ROWS = 16      # 10 used rows, padded to a sublane multiple

# Packed-slab row layout (all rows lane-padded to LANES):
#   row 0      : x                  (1, 3)
#   rows 1..3  : fc1.weight.T rows  (3, 3)
#   rows 4..6  : fc2.weight.T rows  (3, 3)
#   row 7      : lif1 threshold     (1, 3)
#   row 8      : lif2 threshold     (1, 3)
#   row 9      : lif3 threshold     (1, 3)
#   rows 10..15: zero padding


def net_chip_kernel(packed_ref, out_ref):
    p = packed_ref[...]                       # (PACK_ROWS, LANES) f32, 2 vregs
    x = p[0:1, :]
    w1t0, w1t1, w1t2 = p[1:2, :], p[2:3, :], p[3:4, :]
    w2t0, w2t1, w2t2 = p[4:5, :], p[5:6, :], p[6:7, :]
    thr1, thr2, thr3 = p[7:8, :], p[8:9, :], p[9:10, :]

    def matvec3(v, r0, r1, r2):
        # (1,3) @ (3,L) done on the VPU: 3 lane-broadcast multiplies + 2 adds.
        # Only lanes 0..2 of v are read; padded lanes of r* are zero, so the
        # padded lanes of the result stay zero.
        return v[:, 0:1] * r0 + v[:, 1:2] * r1 + v[:, 2:3] * r2

    def lif(cur, mem, thr):
        # spk = (mem - threshold > 0).float(); reset = beta*spk*thr;
        # mem' = beta*mem + cur - reset.   With BETA == 0 (compile-time
        # constant) this folds exactly to mem' = cur.
        spk = (mem - thr > 0.0).astype(jnp.float32)
        if BETA == 0.0:
            return spk, cur
        reset = jnp.float32(BETA) * spk * thr
        return spk, jnp.float32(BETA) * mem + cur - reset

    zeros = jnp.zeros_like(x)
    mem1, mem2, mem3 = zeros, zeros, zeros

    # Loop-invariant: layer-1 current is identical every time step.
    cur1 = matvec3(x, w1t0, w1t1, w1t2)

    spk_rows, mem_rows = [], []
    # Static, fully-unrolled recurrence (NUM_STEPS is a small constant).
    for _ in range(NUM_STEPS):
        spk1, mem1 = lif(cur1, mem1, thr1)
        cur2 = matvec3(spk1, w2t0, w2t1, w2t2)
        spk2, mem2 = lif(cur2, mem2, thr2)
        # NOTE: reference forward reuses fc2 here (fc3 is never applied).
        cur3 = matvec3(spk2, w2t0, w2t1, w2t2)
        spk3, mem3 = lif(cur3, mem3, thr3)
        spk_rows.append(spk3)
        # NOTE: reference appends mem2 (not mem3) to mem3_rec.
        mem_rows.append(mem2)

    # Single full-block, lane-dense store: rows 0..7 = spk3, rows 8..15 = mem2.
    out_ref[...] = jnp.concatenate(spk_rows + mem_rows, axis=0)


def _pad_row(row):
    row = row.astype(jnp.float32)
    return jnp.pad(row, ((0, 0), (0, LANES - row.shape[1])))


def net_chip_forward(x, w1, w2, thr1, thr2, thr3):
    # x: [1, 3]; w1, w2: [out, in] (torch layout); thr*: [1, 3]
    w1t = w1.T  # (in, out) so cur = v @ w1t == torch's v @ W.T
    w2t = w2.T
    rows = [x,
            w1t[0:1], w1t[1:2], w1t[2:3],
            w2t[0:1], w2t[1:2], w2t[2:3],
            thr1, thr2, thr3]
    packed = jnp.concatenate([_pad_row(r) for r in rows], axis=0)
    packed = jnp.pad(packed, ((0, PACK_ROWS - packed.shape[0]), (0, 0)))

    vmem = pl.BlockSpec(memory_space=pltpu.MemorySpace.VMEM)
    out = pl.pallas_call(
        net_chip_kernel,
        out_shape=jax.ShapeDtypeStruct((2 * NUM_STEPS, LANES), jnp.float32),
        in_specs=[vmem],
        out_specs=vmem,
    )(packed)

    spk_rec = out[:NUM_STEPS, :NUM_HIDDEN]
    mem_rec = out[NUM_STEPS:, :NUM_HIDDEN]
    return spk_rec, mem_rec


def net_chip_reference(x, w1, w2, thr1, thr2, thr3):
    # Pure-JAX reference mirroring the PyTorch forward (beta = 0).
    beta = BETA
    mem1 = mem2 = mem3 = jnp.zeros((1, NUM_HIDDEN), jnp.float32)

    def lif(cur, mem, thr):
        spk = (mem - thr > 0.0).astype(jnp.float32)
        reset = beta * spk * thr
        return spk, beta * mem + cur - reset

    spk_rec, mem_rec = [], []
    for _ in range(NUM_STEPS):
        cur1 = x @ w1.T
        spk1, mem1 = lif(cur1, mem1, thr1)
        cur2 = spk1 @ w2.T
        spk2, mem2 = lif(cur2, mem2, thr2)
        cur3 = spk2 @ w2.T          # fc2 reused, as in the reference
        spk3, mem3 = lif(cur3, mem3, thr3)
        spk_rec.append(spk3[0])
        mem_rec.append(mem2[0])     # mem2 recorded, as in the reference
    return jnp.stack(spk_rec, axis=0), jnp.stack(mem_rec, axis=0)


if __name__ == "__main__":
    key = jax.random.PRNGKey(0)
    k_w1, k_w2, k_w3, k_thr_in, k_thr1, k_thr2, k_thr3, k_x = jax.random.split(key, 8)

    bound = 1.0 / float(jnp.sqrt(jnp.float32(NUM_INPUTS)))
    # nn.Linear(in, out, bias=False) weight shape: [out, in], U(-1/sqrt(in), 1/sqrt(in))
    w1 = jax.random.uniform(k_w1, (NUM_HIDDEN, NUM_INPUTS), jnp.float32, -bound, bound)
    w2 = jax.random.uniform(k_w2, (NUM_HIDDEN, NUM_HIDDEN), jnp.float32, -bound, bound)
    w3 = jax.random.uniform(k_w3, (1, NUM_HIDDEN), jnp.float32, -bound, bound)  # fc3: unused in forward
    thr_in = jax.random.uniform(k_thr_in, (1, NUM_HIDDEN), jnp.float32)          # input_layer: unused in forward
    # Thresholds: torch.rand(3) in [0, 1)
    thr1 = jax.random.uniform(k_thr1, (1, NUM_HIDDEN), jnp.float32)
    thr2 = jax.random.uniform(k_thr2, (1, NUM_HIDDEN), jnp.float32)
    thr3 = jax.random.uniform(k_thr3, (1, NUM_HIDDEN), jnp.float32)
    x = jax.random.normal(k_x, (1, NUM_INPUTS), jnp.float32)

    spk_rec, mem_rec = net_chip_forward(x, w1, w2, thr1, thr2, thr3)
    spk_rec = jax.block_until_ready(spk_rec)
    mem_rec = jax.block_until_ready(mem_rec)

    ref_spk, ref_mem = net_chip_reference(x, w1, w2, thr1, thr2, thr3)
    assert spk_rec.shape == (NUM_STEPS, NUM_HIDDEN)
    assert mem_rec.shape == (NUM_STEPS, NUM_HIDDEN)
    assert jnp.allclose(spk_rec, ref_spk, atol=1e-5)
    assert jnp.allclose(mem_rec, ref_mem, atol=1e-5)
    print("KERNEL_OK")
</pallas_src>

<mosaic_0001>
module attributes {stable_mosaic.version = 11 : i64} {
  func.func @net_chip_kernel(%arg0: memref<16x128xf32, #tpu.memory_space<vmem>>, %arg1: memref<16x128xf32, #tpu.memory_space<vmem>>) attributes {dimension_semantics = [], scalar_prefetch = 0 : i64, scratch_operands = 0 : i64, tpu.core_type = #tpu.core_type<tc>} {
    %c0 = arith.constant 0 : index
    %c0_0 = arith.constant 0 : index
    %0 = vector.load %arg0[%c0, %c0_0] : memref<16x128xf32, #tpu.memory_space<vmem>>, vector<16x128xf32>
    %1 = vector.extract_strided_slice %0 {offsets = [0, 0], sizes = [1, 128], strides = [1, 1]} : vector<16x128xf32> to vector<1x128xf32>
    %2 = vector.extract_strided_slice %0 {offsets = [1, 0], sizes = [1, 128], strides = [1, 1]} : vector<16x128xf32> to vector<1x128xf32>
    %3 = vector.extract_strided_slice %0 {offsets = [2, 0], sizes = [1, 128], strides = [1, 1]} : vector<16x128xf32> to vector<1x128xf32>
    %4 = vector.extract_strided_slice %0 {offsets = [3, 0], sizes = [1, 128], strides = [1, 1]} : vector<16x128xf32> to vector<1x128xf32>
    %5 = vector.extract_strided_slice %0 {offsets = [4, 0], sizes = [1, 128], strides = [1, 1]} : vector<16x128xf32> to vector<1x128xf32>
    %6 = vector.extract_strided_slice %0 {offsets = [5, 0], sizes = [1, 128], strides = [1, 1]} : vector<16x128xf32> to vector<1x128xf32>
    %7 = vector.extract_strided_slice %0 {offsets = [6, 0], sizes = [1, 128], strides = [1, 1]} : vector<16x128xf32> to vector<1x128xf32>
    %8 = vector.extract_strided_slice %0 {offsets = [7, 0], sizes = [1, 128], strides = [1, 1]} : vector<16x128xf32> to vector<1x128xf32>
    %9 = vector.extract_strided_slice %0 {offsets = [8, 0], sizes = [1, 128], strides = [1, 1]} : vector<16x128xf32> to vector<1x128xf32>
    %10 = vector.extract_strided_slice %0 {offsets = [9, 0], sizes = [1, 128], strides = [1, 1]} : vector<16x128xf32> to vector<1x128xf32>
    %cst = arith.constant 0.000000e+00 : f32
    %11 = vector.broadcast %cst : f32 to vector<1x128xf32>
    %12 = vector.extract_strided_slice %1 {offsets = [0, 0], sizes = [1, 1], strides = [1, 1]} : vector<1x128xf32> to vector<1x1xf32>
    %13 = vector.broadcast %12 : vector<1x1xf32> to vector<1x128xf32>
    %14 = arith.mulf %13, %2 : vector<1x128xf32>
    %15 = vector.extract_strided_slice %1 {offsets = [0, 1], sizes = [1, 1], strides = [1, 1]} : vector<1x128xf32> to vector<1x1xf32>
    %16 = vector.broadcast %15 : vector<1x1xf32> to vector<1x128xf32>
    %17 = arith.mulf %16, %3 : vector<1x128xf32>
    %18 = arith.addf %14, %17 : vector<1x128xf32>
    %19 = vector.extract_strided_slice %1 {offsets = [0, 2], sizes = [1, 1], strides = [1, 1]} : vector<1x128xf32> to vector<1x1xf32>
    %20 = vector.broadcast %19 : vector<1x1xf32> to vector<1x128xf32>
    %21 = arith.mulf %20, %4 : vector<1x128xf32>
    %22 = arith.addf %18, %21 : vector<1x128xf32>
    %23 = arith.subf %11, %8 : vector<1x128xf32>
    %cst_1 = arith.constant 0.000000e+00 : f32
    %24 = vector.broadcast %cst_1 : f32 to vector<1x128xf32>
    %25 = arith.cmpf ogt, %23, %24 : vector<1x128xf32>
    %26 = arith.extui %25 : vector<1x128xi1> to vector<1x128xi32>
    %27 = arith.sitofp %26 : vector<1x128xi32> to vector<1x128xf32>
    %28 = vector.extract_strided_slice %27 {offsets = [0, 0], sizes = [1, 1], strides = [1, 1]} : vector<1x128xf32> to vector<1x1xf32>
    %29 = vector.broadcast %28 : vector<1x1xf32> to vector<1x128xf32>
    %30 = arith.mulf %29, %5 : vector<1x128xf32>
    %31 = vector.extract_strided_slice %27 {offsets = [0, 1], sizes = [1, 1], strides = [1, 1]} : vector<1x128xf32> to vector<1x1xf32>
    %32 = vector.broadcast %31 : vector<1x1xf32> to vector<1x128xf32>
    %33 = arith.mulf %32, %6 : vector<1x128xf32>
    %34 = arith.addf %30, %33 : vector<1x128xf32>
    %35 = vector.extract_strided_slice %27 {offsets = [0, 2], sizes = [1, 1], strides = [1, 1]} : vector<1x128xf32> to vector<1x1xf32>
    %36 = vector.broadcast %35 : vector<1x1xf32> to vector<1x128xf32>
    %37 = arith.mulf %36, %7 : vector<1x128xf32>
    %38 = arith.addf %34, %37 : vector<1x128xf32>
    %39 = arith.subf %11, %9 : vector<1x128xf32>
    %cst_2 = arith.constant 0.000000e+00 : f32
    %40 = vector.broadcast %cst_2 : f32 to vector<1x128xf32>
    %41 = arith.cmpf ogt, %39, %40 : vector<1x128xf32>
    %42 = arith.extui %41 : vector<1x128xi1> to vector<1x128xi32>
    %43 = arith.sitofp %42 : vector<1x128xi32> to vector<1x128xf32>
    %44 = vector.extract_strided_slice %43 {offsets = [0, 0], sizes = [1, 1], strides = [1, 1]} : vector<1x128xf32> to vector<1x1xf32>
    %45 = vector.broadcast %44 : vector<1x1xf32> to vector<1x128xf32>
    %46 = arith.mulf %45, %5 : vector<1x128xf32>
    %47 = vector.extract_strided_slice %43 {offsets = [0, 1], sizes = [1, 1], strides = [1, 1]} : vector<1x128xf32> to vector<1x1xf32>
    %48 = vector.broadcast %47 : vector<1x1xf32> to vector<1x128xf32>
    %49 = arith.mulf %48, %6 : vector<1x128xf32>
    %50 = arith.addf %46, %49 : vector<1x128xf32>
    %51 = vector.extract_strided_slice %43 {offsets = [0, 2], sizes = [1, 1], strides = [1, 1]} : vector<1x128xf32> to vector<1x1xf32>
    %52 = vector.broadcast %51 : vector<1x1xf32> to vector<1x128xf32>
    %53 = arith.mulf %52, %7 : vector<1x128xf32>
    %54 = arith.addf %50, %53 : vector<1x128xf32>
    %55 = arith.subf %11, %10 : vector<1x128xf32>
    %cst_3 = arith.constant 0.000000e+00 : f32
    %56 = vector.broadcast %cst_3 : f32 to vector<1x128xf32>
    %57 = arith.cmpf ogt, %55, %56 : vector<1x128xf32>
    %58 = arith.extui %57 : vector<1x128xi1> to vector<1x128xi32>
    %59 = arith.sitofp %58 : vector<1x128xi32> to vector<1x128xf32>
    %60 = arith.subf %22, %8 : vector<1x128xf32>
    %cst_4 = arith.constant 0.000000e+00 : f32
    %61 = vector.broadcast %cst_4 : f32 to vector<1x128xf32>
    %62 = arith.cmpf ogt, %60, %61 : vector<1x128xf32>
    %63 = arith.extui %62 : vector<1x128xi1> to vector<1x128xi32>
    %64 = arith.sitofp %63 : vector<1x128xi32> to vector<1x128xf32>
    %65 = vector.extract_strided_slice %64 {offsets = [0, 0], sizes = [1, 1], strides = [1, 1]} : vector<1x128xf32> to vector<1x1xf32>
    %66 = vector.broadcast %65 : vector<1x1xf32> to vector<1x128xf32>
    %67 = arith.mulf %66, %5 : vector<1x128xf32>
    %68 = vector.extract_strided_slice %64 {offsets = [0, 1], sizes = [1, 1], strides = [1, 1]} : vector<1x128xf32> to vector<1x1xf32>
    %69 = vector.broadcast %68 : vector<1x1xf32> to vector<1x128xf32>
    %70 = arith.mulf %69, %6 : vector<1x128xf32>
    %71 = arith.addf %67, %70 : vector<1x128xf32>
    %72 = vector.extract_strided_slice %64 {offsets = [0, 2], sizes = [1, 1], strides = [1, 1]} : vector<1x128xf32> to vector<1x1xf32>
    %73 = vector.broadcast %72 : vector<1x1xf32> to vector<1x128xf32>
    %74 = arith.mulf %73, %7 : vector<1x128xf32>
    %75 = arith.addf %71, %74 : vector<1x128xf32>
    %76 = arith.subf %38, %9 : vector<1x128xf32>
    %cst_5 = arith.constant 0.000000e+00 : f32
    %77 = vector.broadcast %cst_5 : f32 to vector<1x128xf32>
    %78 = arith.cmpf ogt, %76, %77 : vector<1x128xf32>
    %79 = arith.extui %78 : vector<1x128xi1> to vector<1x128xi32>
    %80 = arith.sitofp %79 : vector<1x128xi32> to vector<1x128xf32>
    %81 = vector.extract_strided_slice %80 {offsets = [0, 0], sizes = [1, 1], strides = [1, 1]} : vector<1x128xf32> to vector<1x1xf32>
    %82 = vector.broadcast %81 : vector<1x1xf32> to vector<1x128xf32>
    %83 = arith.mulf %82, %5 : vector<1x128xf32>
    %84 = vector.extract_strided_slice %80 {offsets = [0, 1], sizes = [1, 1], strides = [1, 1]} : vector<1x128xf32> to vector<1x1xf32>
    %85 = vector.broadcast %84 : vector<1x1xf32> to vector<1x128xf32>
    %86 = arith.mulf %85, %6 : vector<1x128xf32>
    %87 = arith.addf %83, %86 : vector<1x128xf32>
    %88 = vector.extract_strided_slice %80 {offsets = [0, 2], sizes = [1, 1], strides = [1, 1]} : vector<1x128xf32> to vector<1x1xf32>
    %89 = vector.broadcast %88 : vector<1x1xf32> to vector<1x128xf32>
    %90 = arith.mulf %89, %7 : vector<1x128xf32>
    %91 = arith.addf %87, %90 : vector<1x128xf32>
    %92 = arith.subf %54, %10 : vector<1x128xf32>
    %cst_6 = arith.constant 0.000000e+00 : f32
    %93 = vector.broadcast %cst_6 : f32 to vector<1x128xf32>
    %94 = arith.cmpf ogt, %92, %93 : vector<1x128xf32>
    %95 = arith.extui %94 : vector<1x128xi1> to vector<1x128xi32>
    %96 = arith.sitofp %95 : vector<1x128xi32> to vector<1x128xf32>
    %97 = arith.subf %22, %8 : vector<1x128xf32>
    %cst_7 = arith.constant 0.000000e+00 : f32
    %98 = vector.broadcast %cst_7 : f32 to vector<1x128xf32>
    %99 = arith.cmpf ogt, %97, %98 : vector<1x128xf32>
    %100 = arith.extui %99 : vector<1x128xi1> to vector<1x128xi32>
    %101 = arith.sitofp %100 : vector<1x128xi32> to vector<1x128xf32>
    %102 = vector.extract_strided_slice %101 {offsets = [0, 0], sizes = [1, 1], strides = [1, 1]} : vector<1x128xf32> to vector<1x1xf32>
    %103 = vector.broadcast %102 : vector<1x1xf32> to vector<1x128xf32>
    %104 = arith.mulf %103, %5 : vector<1x128xf32>
    %105 = vector.extract_strided_slice %101 {offsets = [0, 1], sizes = [1, 1], strides = [1, 1]} : vector<1x128xf32> to vector<1x1xf32>
    %106 = vector.broadcast %105 : vector<1x1xf32> to vector<1x128xf32>
    %107 = arith.mulf %106, %6 : vector<1x128xf32>
    %108 = arith.addf %104, %107 : vector<1x128xf32>
    %109 = vector.extract_strided_slice %101 {offsets = [0, 2], sizes = [1, 1], strides = [1, 1]} : vector<1x128xf32> to vector<1x1xf32>
    %110 = vector.broadcast %109 : vector<1x1xf32> to vector<1x128xf32>
    %111 = arith.mulf %110, %7 : vector<1x128xf32>
    %112 = arith.addf %108, %111 : vector<1x128xf32>
    %113 = arith.subf %75, %9 : vector<1x128xf32>
    %cst_8 = arith.constant 0.000000e+00 : f32
    %114 = vector.broadcast %cst_8 : f32 to vector<1x128xf32>
    %115 = arith.cmpf ogt, %113, %114 : vector<1x128xf32>
    %116 = arith.extui %115 : vector<1x128xi1> to vector<1x128xi32>
    %117 = arith.sitofp %116 : vector<1x128xi32> to vector<1x128xf32>
    %118 = vector.extract_strided_slice %117 {offsets = [0, 0], sizes = [1, 1], strides = [1, 1]} : vector<1x128xf32> to vector<1x1xf32>
    %119 = vector.broadcast %118 : vector<1x1xf32> to vector<1x128xf32>
    %120 = arith.mulf %119, %5 : vector<1x128xf32>
    %121 = vector.extract_strided_slice %117 {offsets = [0, 1], sizes = [1, 1], strides = [1, 1]} : vector<1x128xf32> to vector<1x1xf32>
    %122 = vector.broadcast %121 : vector<1x1xf32> to vector<1x128xf32>
    %123 = arith.mulf %122, %6 : vector<1x128xf32>
    %124 = arith.addf %120, %123 : vector<1x128xf32>
    %125 = vector.extract_strided_slice %117 {offsets = [0, 2], sizes = [1, 1], strides = [1, 1]} : vector<1x128xf32> to vector<1x1xf32>
    %126 = vector.broadcast %125 : vector<1x1xf32> to vector<1x128xf32>
    %127 = arith.mulf %126, %7 : vector<1x128xf32>
    %128 = arith.addf %124, %127 : vector<1x128xf32>
    %129 = arith.subf %91, %10 : vector<1x128xf32>
    %cst_9 = arith.constant 0.000000e+00 : f32
    %130 = vector.broadcast %cst_9 : f32 to vector<1x128xf32>
    %131 = arith.cmpf ogt, %129, %130 : vector<1x128xf32>
    %132 = arith.extui %131 : vector<1x128xi1> to vector<1x128xi32>
    %133 = arith.sitofp %132 : vector<1x128xi32> to vector<1x128xf32>
    %134 = arith.subf %22, %8 : vector<1x128xf32>
    %cst_10 = arith.constant 0.000000e+00 : f32
    %135 = vector.broadcast %cst_10 : f32 to vector<1x128xf32>
    %136 = arith.cmpf ogt, %134, %135 : vector<1x128xf32>
    %137 = arith.extui %136 : vector<1x128xi1> to vector<1x128xi32>
    %138 = arith.sitofp %137 : vector<1x128xi32> to vector<1x128xf32>
    %139 = vector.extract_strided_slice %138 {offsets = [0, 0], sizes = [1, 1], strides = [1, 1]} : vector<1x128xf32> to vector<1x1xf32>
    %140 = vector.broadcast %139 : vector<1x1xf32> to vector<1x128xf32>
    %141 = arith.mulf %140, %5 : vector<1x128xf32>
    %142 = vector.extract_strided_slice %138 {offsets = [0, 1], sizes = [1, 1], strides = [1, 1]} : vector<1x128xf32> to vector<1x1xf32>
    %143 = vector.broadcast %142 : vector<1x1xf32> to vector<1x128xf32>
    %144 = arith.mulf %143, %6 : vector<1x128xf32>
    %145 = arith.addf %141, %144 : vector<1x128xf32>
    %146 = vector.extract_strided_slice %138 {offsets = [0, 2], sizes = [1, 1], strides = [1, 1]} : vector<1x128xf32> to vector<1x1xf32>
    %147 = vector.broadcast %146 : vector<1x1xf32> to vector<1x128xf32>
    %148 = arith.mulf %147, %7 : vector<1x128xf32>
    %149 = arith.addf %145, %148 : vector<1x128xf32>
    %150 = arith.subf %112, %9 : vector<1x128xf32>
    %cst_11 = arith.constant 0.000000e+00 : f32
    %151 = vector.broadcast %cst_11 : f32 to vector<1x128xf32>
    %152 = arith.cmpf ogt, %150, %151 : vector<1x128xf32>
    %153 = arith.extui %152 : vector<1x128xi1> to vector<1x128xi32>
    %154 = arith.sitofp %153 : vector<1x128xi32> to vector<1x128xf32>
    %155 = vector.extract_strided_slice %154 {offsets = [0, 0], sizes = [1, 1], strides = [1, 1]} : vector<1x128xf32> to vector<1x1xf32>
    %156 = vector.broadcast %155 : vector<1x1xf32> to vector<1x128xf32>
    %157 = arith.mulf %156, %5 : vector<1x128xf32>
    %158 = vector.extract_strided_slice %154 {offsets = [0, 1], sizes = [1, 1], strides = [1, 1]} : vector<1x128xf32> to vector<1x1xf32>
    %159 = vector.broadcast %158 : vector<1x1xf32> to vector<1x128xf32>
    %160 = arith.mulf %159, %6 : vector<1x128xf32>
    %161 = arith.addf %157, %160 : vector<1x128xf32>
    %162 = vector.extract_strided_slice %154 {offsets = [0, 2], sizes = [1, 1], strides = [1, 1]} : vector<1x128xf32> to vector<1x1xf32>
    %163 = vector.broadcast %162 : vector<1x1xf32> to vector<1x128xf32>
    %164 = arith.mulf %163, %7 : vector<1x128xf32>
    %165 = arith.addf %161, %164 : vector<1x128xf32>
    %166 = arith.subf %128, %10 : vector<1x128xf32>
    %cst_12 = arith.constant 0.000000e+00 : f32
    %167 = vector.broadcast %cst_12 : f32 to vector<1x128xf32>
    %168 = arith.cmpf ogt, %166, %167 : vector<1x128xf32>
    %169 = arith.extui %168 : vector<1x128xi1> to vector<1x128xi32>
    %170 = arith.sitofp %169 : vector<1x128xi32> to vector<1x128xf32>
    %171 = arith.subf %22, %8 : vector<1x128xf32>
    %cst_13 = arith.constant 0.000000e+00 : f32
    %172 = vector.broadcast %cst_13 : f32 to vector<1x128xf32>
    %173 = arith.cmpf ogt, %171, %172 : vector<1x128xf32>
    %174 = arith.extui %173 : vector<1x128xi1> to vector<1x128xi32>
    %175 = arith.sitofp %174 : vector<1x128xi32> to vector<1x128xf32>
    %176 = vector.extract_strided_slice %175 {offsets = [0, 0], sizes = [1, 1], strides = [1, 1]} : vector<1x128xf32> to vector<1x1xf32>
    %177 = vector.broadcast %176 : vector<1x1xf32> to vector<1x128xf32>
    %178 = arith.mulf %177, %5 : vector<1x128xf32>
    %179 = vector.extract_strided_slice %175 {offsets = [0, 1], sizes = [1, 1], strides = [1, 1]} : vector<1x128xf32> to vector<1x1xf32>
    %180 = vector.broadcast %179 : vector<1x1xf32> to vector<1x128xf32>
    %181 = arith.mulf %180, %6 : vector<1x128xf32>
    %182 = arith.addf %178, %181 : vector<1x128xf32>
    %183 = vector.extract_strided_slice %175 {offsets = [0, 2], sizes = [1, 1], strides = [1, 1]} : vector<1x128xf32> to vector<1x1xf32>
    %184 = vector.broadcast %183 : vector<1x1xf32> to vector<1x128xf32>
    %185 = arith.mulf %184, %7 : vector<1x128xf32>
    %186 = arith.addf %182, %185 : vector<1x128xf32>
    %187 = arith.subf %149, %9 : vector<1x128xf32>
    %cst_14 = arith.constant 0.000000e+00 : f32
    %188 = vector.broadcast %cst_14 : f32 to vector<1x128xf32>
    %189 = arith.cmpf ogt, %187, %188 : vector<1x128xf32>
    %190 = arith.extui %189 : vector<1x128xi1> to vector<1x128xi32>
    %191 = arith.sitofp %190 : vector<1x128xi32> to vector<1x128xf32>
    %192 = vector.extract_strided_slice %191 {offsets = [0, 0], sizes = [1, 1], strides = [1, 1]} : vector<1x128xf32> to vector<1x1xf32>
    %193 = vector.broadcast %192 : vector<1x1xf32> to vector<1x128xf32>
    %194 = arith.mulf %193, %5 : vector<1x128xf32>
    %195 = vector.extract_strided_slice %191 {offsets = [0, 1], sizes = [1, 1], strides = [1, 1]} : vector<1x128xf32> to vector<1x1xf32>
    %196 = vector.broadcast %195 : vector<1x1xf32> to vector<1x128xf32>
    %197 = arith.mulf %196, %6 : vector<1x128xf32>
    %198 = arith.addf %194, %197 : vector<1x128xf32>
    %199 = vector.extract_strided_slice %191 {offsets = [0, 2], sizes = [1, 1], strides = [1, 1]} : vector<1x128xf32> to vector<1x1xf32>
    %200 = vector.broadcast %199 : vector<1x1xf32> to vector<1x128xf32>
    %201 = arith.mulf %200, %7 : vector<1x128xf32>
    %202 = arith.addf %198, %201 : vector<1x128xf32>
    %203 = arith.subf %165, %10 : vector<1x128xf32>
    %cst_15 = arith.constant 0.000000e+00 : f32
    %204 = vector.broadcast %cst_15 : f32 to vector<1x128xf32>
    %205 = arith.cmpf ogt, %203, %204 : vector<1x128xf32>
    %206 = arith.extui %205 : vector<1x128xi1> to vector<1x128xi32>
    %207 = arith.sitofp %206 : vector<1x128xi32> to vector<1x128xf32>
    %208 = arith.subf %22, %8 : vector<1x128xf32>
    %cst_16 = arith.constant 0.000000e+00 : f32
    %209 = vector.broadcast %cst_16 : f32 to vector<1x128xf32>
    %210 = arith.cmpf ogt, %208, %209 : vector<1x128xf32>
    %211 = arith.extui %210 : vector<1x128xi1> to vector<1x128xi32>
    %212 = arith.sitofp %211 : vector<1x128xi32> to vector<1x128xf32>
    %213 = vector.extract_strided_slice %212 {offsets = [0, 0], sizes = [1, 1], strides = [1, 1]} : vector<1x128xf32> to vector<1x1xf32>
    %214 = vector.broadcast %213 : vector<1x1xf32> to vector<1x128xf32>
    %215 = arith.mulf %214, %5 : vector<1x128xf32>
    %216 = vector.extract_strided_slice %212 {offsets = [0, 1], sizes = [1, 1], strides = [1, 1]} : vector<1x128xf32> to vector<1x1xf32>
    %217 = vector.broadcast %216 : vector<1x1xf32> to vector<1x128xf32>
    %218 = arith.mulf %217, %6 : vector<1x128xf32>
    %219 = arith.addf %215, %218 : vector<1x128xf32>
    %220 = vector.extract_strided_slice %212 {offsets = [0, 2], sizes = [1, 1], strides = [1, 1]} : vector<1x128xf32> to vector<1x1xf32>
    %221 = vector.broadcast %220 : vector<1x1xf32> to vector<1x128xf32>
    %222 = arith.mulf %221, %7 : vector<1x128xf32>
    %223 = arith.addf %219, %222 : vector<1x128xf32>
    %224 = arith.subf %186, %9 : vector<1x128xf32>
    %cst_17 = arith.constant 0.000000e+00 : f32
    %225 = vector.broadcast %cst_17 : f32 to vector<1x128xf32>
    %226 = arith.cmpf ogt, %224, %225 : vector<1x128xf32>
    %227 = arith.extui %226 : vector<1x128xi1> to vector<1x128xi32>
    %228 = arith.sitofp %227 : vector<1x128xi32> to vector<1x128xf32>
    %229 = vector.extract_strided_slice %228 {offsets = [0, 0], sizes = [1, 1], strides = [1, 1]} : vector<1x128xf32> to vector<1x1xf32>
    %230 = vector.broadcast %229 : vector<1x1xf32> to vector<1x128xf32>
    %231 = arith.mulf %230, %5 : vector<1x128xf32>
    %232 = vector.extract_strided_slice %228 {offsets = [0, 1], sizes = [1, 1], strides = [1, 1]} : vector<1x128xf32> to vector<1x1xf32>
    %233 = vector.broadcast %232 : vector<1x1xf32> to vector<1x128xf32>
    %234 = arith.mulf %233, %6 : vector<1x128xf32>
    %235 = arith.addf %231, %234 : vector<1x128xf32>
    %236 = vector.extract_strided_slice %228 {offsets = [0, 2], sizes = [1, 1], strides = [1, 1]} : vector<1x128xf32> to vector<1x1xf32>
    %237 = vector.broadcast %236 : vector<1x1xf32> to vector<1x128xf32>
    %238 = arith.mulf %237, %7 : vector<1x128xf32>
    %239 = arith.addf %235, %238 : vector<1x128xf32>
    %240 = arith.subf %202, %10 : vector<1x128xf32>
    %cst_18 = arith.constant 0.000000e+00 : f32
    %241 = vector.broadcast %cst_18 : f32 to vector<1x128xf32>
    %242 = arith.cmpf ogt, %240, %241 : vector<1x128xf32>
    %243 = arith.extui %242 : vector<1x128xi1> to vector<1x128xi32>
    %244 = arith.sitofp %243 : vector<1x128xi32> to vector<1x128xf32>
    %245 = arith.subf %22, %8 : vector<1x128xf32>
    %cst_19 = arith.constant 0.000000e+00 : f32
    %246 = vector.broadcast %cst_19 : f32 to vector<1x128xf32>
    %247 = arith.cmpf ogt, %245, %246 : vector<1x128xf32>
    %248 = arith.extui %247 : vector<1x128xi1> to vector<1x128xi32>
    %249 = arith.sitofp %248 : vector<1x128xi32> to vector<1x128xf32>
    %250 = vector.extract_strided_slice %249 {offsets = [0, 0], sizes = [1, 1], strides = [1, 1]} : vector<1x128xf32> to vector<1x1xf32>
    %251 = vector.broadcast %250 : vector<1x1xf32> to vector<1x128xf32>
    %252 = arith.mulf %251, %5 : vector<1x128xf32>
    %253 = vector.extract_strided_slice %249 {offsets = [0, 1], sizes = [1, 1], strides = [1, 1]} : vector<1x128xf32> to vector<1x1xf32>
    %254 = vector.broadcast %253 : vector<1x1xf32> to vector<1x128xf32>
    %255 = arith.mulf %254, %6 : vector<1x128xf32>
    %256 = arith.addf %252, %255 : vector<1x128xf32>
    %257 = vector.extract_strided_slice %249 {offsets = [0, 2], sizes = [1, 1], strides = [1, 1]} : vector<1x128xf32> to vector<1x1xf32>
    %258 = vector.broadcast %257 : vector<1x1xf32> to vector<1x128xf32>
    %259 = arith.mulf %258, %7 : vector<1x128xf32>
    %260 = arith.addf %256, %259 : vector<1x128xf32>
    %261 = arith.subf %223, %9 : vector<1x128xf32>
    %cst_20 = arith.constant 0.000000e+00 : f32
    %262 = vector.broadcast %cst_20 : f32 to vector<1x128xf32>
    %263 = arith.cmpf ogt, %261, %262 : vector<1x128xf32>
    %264 = arith.extui %263 : vector<1x128xi1> to vector<1x128xi32>
    %265 = arith.sitofp %264 : vector<1x128xi32> to vector<1x128xf32>
    %266 = vector.extract_strided_slice %265 {offsets = [0, 0], sizes = [1, 1], strides = [1, 1]} : vector<1x128xf32> to vector<1x1xf32>
    %267 = vector.broadcast %266 : vector<1x1xf32> to vector<1x128xf32>
    %268 = arith.mulf %267, %5 : vector<1x128xf32>
    %269 = vector.extract_strided_slice %265 {offsets = [0, 1], sizes = [1, 1], strides = [1, 1]} : vector<1x128xf32> to vector<1x1xf32>
    %270 = vector.broadcast %269 : vector<1x1xf32> to vector<1x128xf32>
    %271 = arith.mulf %270, %6 : vector<1x128xf32>
    %272 = arith.addf %268, %271 : vector<1x128xf32>
    %273 = vector.extract_strided_slice %265 {offsets = [0, 2], sizes = [1, 1], strides = [1, 1]} : vector<1x128xf32> to vector<1x1xf32>
    %274 = vector.broadcast %273 : vector<1x1xf32> to vector<1x128xf32>
    %275 = arith.mulf %274, %7 : vector<1x128xf32>
    %276 = arith.addf %272, %275 : vector<1x128xf32>
    %277 = arith.subf %239, %10 : vector<1x128xf32>
    %cst_21 = arith.constant 0.000000e+00 : f32
    %278 = vector.broadcast %cst_21 : f32 to vector<1x128xf32>
    %279 = arith.cmpf ogt, %277, %278 : vector<1x128xf32>
    %280 = arith.extui %279 : vector<1x128xi1> to vector<1x128xi32>
    %281 = arith.sitofp %280 : vector<1x128xi32> to vector<1x128xf32>
    %282 = arith.subf %22, %8 : vector<1x128xf32>
    %cst_22 = arith.constant 0.000000e+00 : f32
    %283 = vector.broadcast %cst_22 : f32 to vector<1x128xf32>
    %284 = arith.cmpf ogt, %282, %283 : vector<1x128xf32>
    %285 = arith.extui %284 : vector<1x128xi1> to vector<1x128xi32>
    %286 = arith.sitofp %285 : vector<1x128xi32> to vector<1x128xf32>
    %287 = vector.extract_strided_slice %286 {offsets = [0, 0], sizes = [1, 1], strides = [1, 1]} : vector<1x128xf32> to vector<1x1xf32>
    %288 = vector.broadcast %287 : vector<1x1xf32> to vector<1x128xf32>
    %289 = arith.mulf %288, %5 : vector<1x128xf32>
    %290 = vector.extract_strided_slice %286 {offsets = [0, 1], sizes = [1, 1], strides = [1, 1]} : vector<1x128xf32> to vector<1x1xf32>
    %291 = vector.broadcast %290 : vector<1x1xf32> to vector<1x128xf32>
    %292 = arith.mulf %291, %6 : vector<1x128xf32>
    %293 = arith.addf %289, %292 : vector<1x128xf32>
    %294 = vector.extract_strided_slice %286 {offsets = [0, 2], sizes = [1, 1], strides = [1, 1]} : vector<1x128xf32> to vector<1x1xf32>
    %295 = vector.broadcast %294 : vector<1x1xf32> to vector<1x128xf32>
    %296 = arith.mulf %295, %7 : vector<1x128xf32>
    %297 = arith.addf %293, %296 : vector<1x128xf32>
    %298 = arith.subf %276, %10 : vector<1x128xf32>
    %cst_23 = arith.constant 0.000000e+00 : f32
    %299 = vector.broadcast %cst_23 : f32 to vector<1x128xf32>
    %300 = arith.cmpf ogt, %298, %299 : vector<1x128xf32>
    %301 = arith.extui %300 : vector<1x128xi1> to vector<1x128xi32>
    %302 = arith.sitofp %301 : vector<1x128xi32> to vector<1x128xf32>
    %303 = tpu.concatenate %59, %96, %133, %170, %207, %244, %281, %302, %38, %75, %112, %149, %186, %223, %260, %297 in 0 : vector<1x128xf32>, vector<1x128xf32>, vector<1x128xf32>, vector<1x128xf32>, vector<1x128xf32>, vector<1x128xf32>, vector<1x128xf32>, vector<1x128xf32>, vector<1x128xf32>, vector<1x128xf32>, vector<1x128xf32>, vector<1x128xf32>, vector<1x128xf32>, vector<1x128xf32>, vector<1x128xf32>, vector<1x128xf32> -> vector<16x128xf32>
    %c0_24 = arith.constant 0 : index
    %c0_25 = arith.constant 0 : index
    %304 = vector.load %arg1[%c0_24, %c0_25] : memref<16x128xf32, #tpu.memory_space<vmem>>, vector<16x128xf32>
    tpu.vector_store %arg1[%c0_24, %c0_25], %303 {strides = array<i32>} : memref<16x128xf32, #tpu.memory_space<vmem>>, vector<16x128xf32>,
    return
  }
}

</mosaic_0001>

<llo_original>
// kernel: tpu_custom_call.1
$region0: #{tpu_custom_call.1}
  #allocation0 [shape = 'u32[]', space=smem, size = 0x4, offset = 0x4, fixed_abs, tag = 'smem constant byte address 0x4 - core index']
  #allocation1 [shape = 'u32[144,128]{1,0:T(1,128)}', space=vmem, size = 0x12000, scoped, tag = 'internal scratch']
  %s0 = inlined_call_operand.hbm [shape: f32[16,128], index: 0, kind: input, shape index: {}]
  %s1 = inlined_call_operand.hbm [shape: f32[16,128], index: 1, kind: output, shape index: {}]
  %s2 = sld [smem:[#allocation0]]
  $region18: #{tpu_custom_call.1} parent=0
    _
  %s4 = ssub.s32 1, %s2
  %s5 = scalar_select 0, %s4, %s2
  $region1: #{tpu_custom_call.1} parent=0
    #allocation2 [shape = 'u8[8192]{0}', space=vmem, size = 0x2000, scoped, tag = 'input window, operand 0, single buffered']
    #allocation3 [shape = 's32[1]{0}', space=sflag, size = 0x4, scoped, tag = 'scoped memory for tpu_custom_call.1']
    #allocation4 [shape = 's32[1]{0}', space=sflag, size = 0x4, scoped, tag = 'scoped memory for tpu_custom_call.1']
    #allocation5 [shape = 'u8[8192]{0}', space=vmem, size = 0x2000, scoped, tag = 'output window, operand 0, single buffered']
    %6 = vsyncpa [#allocation3], 0
    %7 = vsyncpa [#allocation4], 0
    // Predicated region
    $region2: #{tpu_custom_call.1} parent=1 // pred_check
      _
    $region3: #{tpu_custom_call.1} parent=1 // pred_check_branch
      %9 = sbr.rel (0) target = $region5
    $region4: #{tpu_custom_call.1} parent=1 // pred_region
      %s11 = ssub.s32 256, 256
      %12 = vsyncadd [#allocation3], %s11
      %s13 = sshll.u32 [#allocation2], 4
      %s14 = int_to_ptr.vmem [resolvable:$true] %s13
      %19 = dma.hbm_to_vmem [thread:$0]  %s0, 256, %s14, [#allocation3], 128, 128, 8
    $region5: #{tpu_custom_call.1} parent=1 // pred_fallthru
      _
    // Predicated region
    $region6: #{tpu_custom_call.1} parent=1 // pred_check
      _
    $region7: #{tpu_custom_call.1} parent=1 // pred_check_branch
      %21 = sbr.rel (0) target = $region9
    $region8: #{tpu_custom_call.1} parent=1 // pred_region
      %22 = dma.done [#allocation3], 256
    $region9: #{tpu_custom_call.1} parent=1 // pred_fallthru
      _
    %v23 = vld [vmem:[#allocation2] sm:$0xff]
    %v24 = vld [vmem:[#allocation2 + $0x8] sm:$0xff]
    %26 = vset.pattern.permute.xlu0 0
    %27 = vperm.xlu0 %26, %v23
    %v28 = vpop.permute.xlu0 %27
    %v30 = vrot.slane %v23, 1
    %v32 = vmul.f32 %v28, %v30
    %33 = vset.pattern.permute.xlu0 1
    %34 = vperm.xlu0 %33, %v23
    %v35 = vpop.permute.xlu0 %34
    %v37 = vrot.slane %v23, 2
    %v39 = vmul.f32 %v35, %v37
    %v40 = vadd.f32 %v32, %v39
    %41 = vset.pattern.permute.xlu0 2
    %42 = vperm.xlu0 %41, %v23
    %v43 = vpop.permute.xlu0 %42
    %v45 = vrot.slane %v23, 3
    %v47 = vmul.f32 %v43, %v45
    %v48 = vadd.f32 %v40, %v47
    %v49 = vsub.f32 0.0, %v23
    %vm50 = vcmp.gt.f32.partialorder %v49, 0.0
    %v51 = vsel %vm50, 1, 0
    %v52 = vcvt.s32.f32 %v51
    %54 = vset.pattern.permute.xlu0 0
    %55 = vperm.xlu0 %54, %v52
    %v56 = vpop.permute.xlu0 %55
    %v58 = vrot.slane %v23, 5
    %v60 = vmul.f32 %v56, %v58
    %61 = vset.pattern.permute.xlu0 1
    %62 = vperm.xlu0 %61, %v52
    %v63 = vpop.permute.xlu0 %62
    %v65 = vrot.slane %v23, 6
    %v67 = vmul.f32 %v63, %v65
    %v68 = vadd.f32 %v60, %v67
    %69 = vset.pattern.permute.xlu0 2
    %70 = vperm.xlu0 %69, %v52
    %v71 = vpop.permute.xlu0 %70
    %v73 = vrot.slane %v23, 7
    %v75 = vmul.f32 %v71, %v73
    %v76 = vadd.f32 %v68, %v75
    %v77 = vsub.f32 0.0, %v24
    %vm78 = vcmp.gt.f32.partialorder %v77, 0.0
    %v79 = vsel %vm78, 1, 0
    %v80 = vcvt.s32.f32 %v79
    %82 = vset.pattern.permute.xlu0 0
    %83 = vperm.xlu0 %82, %v80
    %v84 = vpop.permute.xlu0 %83
    %v86 = vrot.slane %v23, 4
    %v88 = vmul.f32 %v84, %v86
    %89 = vset.pattern.permute.xlu0 1
    %90 = vperm.xlu0 %89, %v80
    %v91 = vpop.permute.xlu0 %90
    %v93 = vmul.f32 %v91, %v58
    %v94 = vadd.f32 %v88, %v93
    %95 = vset.pattern.permute.xlu0 2
    %96 = vperm.xlu0 %95, %v80
    %v97 = vpop.permute.xlu0 %96
    %v99 = vmul.f32 %v97, %v65
    %v100 = vadd.f32 %v94, %v99
    %v101 = vsub.f32 %v48, %v73
    %vm102 = vcmp.gt.f32.partialorder %v101, 0.0
    %v103 = vsel %vm102, 1, 0
    %v104 = vcvt.s32.f32 %v103
    %106 = vset.pattern.permute.xlu0 0
    %107 = vperm.xlu0 %106, %v104
    %v108 = vpop.permute.xlu0 %107
    %v110 = vmul.f32 %v108, %v86
    %111 = vset.pattern.permute.xlu0 1
    %112 = vperm.xlu0 %111, %v104
    %v113 = vpop.permute.xlu0 %112
    %v115 = vmul.f32 %v113, %v58
    %v116 = vadd.f32 %v110, %v115
    %117 = vset.pattern.permute.xlu0 2
    %118 = vperm.xlu0 %117, %v104
    %v119 = vpop.permute.xlu0 %118
    %v121 = vmul.f32 %v119, %v65
    %v122 = vadd.f32 %v116, %v121
    %v124 = vrot.slane %v24, 1
    %v126 = vsub.f32 %v76, %v124
    %vm127 = vcmp.gt.f32.partialorder %v126, 0.0
    %v128 = vsel %vm127, 1, 0
    %v129 = vcvt.s32.f32 %v128
    %131 = vset.pattern.permute.xlu0 0
    %132 = vperm.xlu0 %131, %v129
    %v133 = vpop.permute.xlu0 %132
    %v135 = vmul.f32 %v133, %v58
    %136 = vset.pattern.permute.xlu0 1
    %137 = vperm.xlu0 %136, %v129
    %v138 = vpop.permute.xlu0 %137
    %v140 = vmul.f32 %v138, %v65
    %v141 = vadd.f32 %v135, %v140
    %142 = vset.pattern.permute.xlu0 2
    %143 = vperm.xlu0 %142, %v129
    %v144 = vpop.permute.xlu0 %143
    %v146 = vmul.f32 %v144, %v73
    %v147 = vadd.f32 %v141, %v146
    %v148 = vsub.f32 %v100, %v124
    %vm149 = vcmp.gt.f32.partialorder %v148, 0.0
    %v150 = vsel %vm149, 1, 0
    %v151 = vcvt.s32.f32 %v150
    %v152 = vsub.f32 %v122, %v24
    %vm153 = vcmp.gt.f32.partialorder %v152, 0.0
    %v154 = vsel %vm153, 1, 0
    %v155 = vcvt.s32.f32 %v154
    %157 = vset.pattern.permute.xlu0 0
    %158 = vperm.xlu0 %157, %v155
    %v159 = vpop.permute.xlu0 %158
    %v161 = vmul.f32 %v159, %v86
    %162 = vset.pattern.permute.xlu0 1
    %163 = vperm.xlu0 %162, %v155
    %v164 = vpop.permute.xlu0 %163
    %v166 = vmul.f32 %v164, %v58
    %v167 = vadd.f32 %v161, %v166
    %168 = vset.pattern.permute.xlu0 2
    %169 = vperm.xlu0 %168, %v155
    %v170 = vpop.permute.xlu0 %169
    %v172 = vmul.f32 %v170, %v65
    %v173 = vadd.f32 %v167, %v172
    %v174 = vrot.slane %v24, 2
    %v176 = vsub.f32 %v147, %v174
    %vm177 = vcmp.gt.f32.partialorder %v176, 0.0
    %v178 = vsel %vm177, 1, 0
    %v179 = vcvt.s32.f32 %v178
    %v180 = vsub.f32 %v173, %v124
    %vm181 = vcmp.gt.f32.partialorder %v180, 0.0
    %v182 = vsel %vm181, 1, 0
    %v183 = vcvt.s32.f32 %v182
    %v184 = vrot.slane %v80, 1
    %v187 = vrot.slane %v151, 7
    %v190 = vrot.slane %v179, 5
    %v193 = vrot.slane %v183, 5
    %v195 = vrot.slane %v183, 4
    %v197 = vrot.slane %v183, 3
    %v199 = vrot.slane %v183, 2
    %v201 = vrot.slane %v183, 1
    %v204 = vrot.slane %v76, 7
    %v207 = vrot.slane %v122, 7
    %v209 = vrot.slane %v122, 6
    %v211 = vrot.slane %v122, 5
    %v213 = vrot.slane %v122, 4
    %v215 = vrot.slane %v122, 3
    %v217 = vrot.slane %v122, 2
    %v219 = vrot.slane %v122, 1
    %vm221 = vcmask 1040384
    %v222 = vsel %vm221, %v184, %v187
    %vm223 = vcmask 1041408
    %v224 = vsel %vm223, %v222, %v190
    %vm225 = vcmask 1042432
    %v226 = vsel %vm225, %v224, %v193
    %vm227 = vcmask 1043456
    %v228 = vsel %vm227, %v226, %v195
    %vm229 = vcmask 1044480
    %v230 = vsel %vm229, %v228, %v197
    %vm231 = vcmask 1045504
    %v232 = vsel %vm231, %v230, %v199
    %vm233 = vcmask 1046528
    %v234 = vsel %vm233, %v232, %v201
    %v235 = vsel %vm221, %v204, %v207
    %v236 = vsel %vm223, %v235, %v209
    %v237 = vsel %vm225, %v236, %v211
    %v238 = vsel %vm227, %v237, %v213
    %v239 = vsel %vm229, %v238, %v215
    %v240 = vsel %vm231, %v239, %v217
    %v241 = vsel %vm233, %v240, %v219
    %242 = vst [vmem:[#allocation5] sm:$0xff] %v234
    %243 = vst [vmem:[#allocation5 + $0x8] sm:$0xff] %v241
    // Predicated region
    $region10: #{tpu_custom_call.1} parent=1 // pred_check
      _
    $region11: #{tpu_custom_call.1} parent=1 // pred_check_branch
      %245 = sbr.rel (0) target = $region13
    $region12: #{tpu_custom_call.1} parent=1 // pred_region
      %s247 = ssub.s32 256, 256
      %248 = vsyncadd [#allocation4], %s247
      %s249 = sshll.u32 [#allocation5], 4
      %s250 = int_to_ptr.vmem [resolvable:$true] %s249
      %255 = dma.vmem_to_hbm [thread:$0]  %s250, 256, %s1, [#allocation4], 128, 128, 8
    $region13: #{tpu_custom_call.1} parent=1 // pred_fallthru
      _
    // Predicated region
    $region14: #{tpu_custom_call.1} parent=1 // pred_check
      _
    $region15: #{tpu_custom_call.1} parent=1 // pred_check_branch
      %257 = sbr.rel (0) target = $region17
    $region16: #{tpu_custom_call.1} parent=1 // pred_region
      %258 = dma.done [#allocation4], 256
    $region17: #{tpu_custom_call.1} parent=1 // pred_fallthru
      _
    %259 = vsyncpa [#allocation3], 1
    %260 = vsyncpa [#allocation4], 1

</llo_original>
